<compile_context>
chip_gen: v7x
topology: tpu7x:2x2x1
jax: 0.10.0
libtpu: 0.0.40
codegen_flags: <defaults>
</compile_context>

<pallas_src>
import functools

import jax
import jax.numpy as jnp
from jax.experimental import pallas as pl
from jax.experimental.pallas import tpu as pltpu


# ---------------------------------------------------------------------------
# Runtime probe: direction of pltpu.roll (expected to match jnp.roll).
# Resolved once, outside jit, so the 3x3 taps are correct on any backend.
# ---------------------------------------------------------------------------

_ROLL_FWD = None


def _roll_is_forward():
    """True iff pltpu.roll moves elements toward higher indices (jnp.roll)."""
    def k(x_ref, o_ref):
        o_ref[...] = pltpu.roll(x_ref[...], shift=1, axis=1)

    x = jnp.arange(8 * 128, dtype=jnp.int32).reshape(8, 128)
    y = pl.pallas_call(k, out_shape=jax.ShapeDtypeStruct((8, 128), jnp.int32))(x)
    return bool(jnp.array_equal(y, jnp.roll(x, 1, axis=1)))


def _get_roll_fwd():
    global _ROLL_FWD
    if _ROLL_FWD is None:
        _ROLL_FWD = _roll_is_forward()
    return _ROLL_FWD


# ---------------------------------------------------------------------------
# Fused DenseLayer kernel (one grid step == `nb` images, lanes = nb*H*W)
# ---------------------------------------------------------------------------

def _dense_layer_kernel(scale1_ref, shift1_ref, w1_ref, b1_ref, w2_ref,
                        x_ref, o_ref, *, H, W, nb, growth, roll_fwd):
    HW = H * W
    L = nb * HW
    x = x_ref[0]                                            # (Cin, L) f32

    # ---- BN1 (inference affine) + ReLU ------------------------------------
    y = jnp.maximum(x * scale1_ref[...] + shift1_ref[...], 0.0)

    # ---- 1x1 conv (BN2 scale folded into weights), BN2 shift bias, ReLU ----
    t = jnp.dot(w1_ref[...], y.astype(w1_ref.dtype),
                preferred_element_type=jnp.float32)         # (Cmid, L) f32
    t = jnp.maximum(t + b1_ref[...], 0.0)

    # ---- 3x3 conv, padding=1: implicit im2col, fully in registers ----------
    # Tap (di, dj) is t rotated along the lane axis by -(di*W + dj) (XLU
    # roll); wrap-around, zero borders and cross-image bleed are handled by a
    # per-tap mask built from one iota.  All 9 taps are stacked along the
    # contraction axis -> ONE (growth, 9*Cmid) @ (9*Cmid, L) MXU dot.
    pos = jax.lax.broadcasted_iota(jnp.int32, (1, L), 1)
    p = pos % HW                                            # pixel within image
    row = p // W
    col = p % W

    taps = []
    for ki in range(3):
        for kj in range(3):
            di, dj = ki - 1, kj - 1
            off = di * W + dj
            if off == 0:
                tap = t
            else:
                shift = (-off) % L if roll_fwd else off % L
                tap = pltpu.roll(t, shift=shift, axis=1)
                ok = None
                if di == -1:
                    ok = row >= 1
                elif di == 1:
                    ok = row <= H - 2
                if dj == -1:
                    cond = col >= 1
                    ok = cond if ok is None else ok & cond
                elif dj == 1:
                    cond = col <= W - 2
                    ok = cond if ok is None else ok & cond
                tap = jnp.where(ok, tap, 0.0)               # mask in f32
            taps.append(tap.astype(w2_ref.dtype))
    stacked = jnp.concatenate(taps, axis=0)                 # (9*Cmid, L) bf16

    conv = jnp.dot(w2_ref[...], stacked,
                   preferred_element_type=jnp.float32)      # (growth, L) f32

    # ---- channel concat: [conv_out, x]  (== torch.cat(dim=1) in NCHW) ------
    o_ref[0, :growth, :] = conv.astype(o_ref.dtype)
    o_ref[0, growth:, :] = x.astype(o_ref.dtype)


def dense_layer_forward(x_nchw, fp, *, images_per_block=None):
    """x_nchw: (N, Cin, H, W) f32; fp: folded parameters (see fold_params)."""
    n, cin, h, w = x_nchw.shape
    hw = h * w
    cmid = fp["w1f"].shape[0]
    growth = fp["w2s"].shape[0]
    cout = cin + growth
    assert fp["w2s"].shape[1] == 9 * cmid

    # Sublane-alignment guard for the unmasked concat stores: the x-copy
    # starts at sublane offset `growth` of the f32 output rows.
    assert growth % 8 == 0, "growth_rate must be a multiple of 8"

    if images_per_block is None:
        # Default: keep >=2 grid steps when possible so both v7x TensorCores
        # get work; single-TC chips (v5e/v6e) can pass images_per_block=n to
        # fold the whole batch into the matmul lane dim (one step, wider N).
        images_per_block = n // 2 if (n % 2 == 0 and n >= 2) else 1
    nb = images_per_block
    assert n % nb == 0
    nsteps = n // nb
    L = nb * hw

    # Layout: per grid step present (Cin, nb*HW) so every matmul/store is
    # lane-dense (L is a multiple of 128 for HW=256).
    xw = (x_nchw.reshape(nsteps, nb, cin, hw)
          .transpose(0, 2, 1, 3)
          .reshape(nsteps, cin, L))

    kernel = functools.partial(_dense_layer_kernel, H=h, W=w, nb=nb,
                               growth=growth, roll_fwd=_get_roll_fwd())
    out = pl.pallas_call(
        kernel,
        out_shape=jax.ShapeDtypeStruct((nsteps, cout, L), jnp.float32),
        grid=(nsteps,),
        in_specs=[
            pl.BlockSpec((cin, 1), lambda i: (0, 0)),            # bn1 scale
            pl.BlockSpec((cin, 1), lambda i: (0, 0)),            # bn1 shift
            pl.BlockSpec((cmid, cin), lambda i: (0, 0)),         # folded conv1
            pl.BlockSpec((cmid, 1), lambda i: (0, 0)),           # folded bias
            pl.BlockSpec((growth, 9 * cmid), lambda i: (0, 0)),  # stacked conv2
            pl.BlockSpec((1, cin, L), lambda i: (i, 0, 0)),      # x
        ],
        out_specs=pl.BlockSpec((1, cout, L), lambda i: (i, 0, 0)),
        compiler_params=pltpu.CompilerParams(
            dimension_semantics=("parallel",),   # batch over both TCs (v7x)
        ),
    )(fp["scale1"], fp["shift1"], fp["w1f"], fp["b1f"], fp["w2s"], xw)

    out = out.reshape(nsteps, cout, nb, hw).transpose(0, 2, 1, 3)
    return out.reshape(n, cout, h, w)


# ---------------------------------------------------------------------------
# Parameter construction (deterministic, PyTorch-layout) and BN folding
# ---------------------------------------------------------------------------

def build_params(key, in_channels, growth_rate):
    cmid = 4 * growth_rate
    ks = jax.random.split(key, 10)
    return dict(
        bn1_gamma=jax.random.uniform(ks[0], (in_channels,), jnp.float32, 0.5, 1.5),
        bn1_beta=jax.random.normal(ks[1], (in_channels,), jnp.float32) * 0.1,
        bn1_mean=jax.random.normal(ks[2], (in_channels,), jnp.float32) * 0.1,
        bn1_var=jax.random.uniform(ks[3], (in_channels,), jnp.float32, 0.5, 1.5),
        conv1_w=jax.random.normal(ks[4], (cmid, in_channels), jnp.float32)
        * (2.0 / in_channels) ** 0.5,
        bn2_gamma=jax.random.uniform(ks[5], (cmid,), jnp.float32, 0.5, 1.5),
        bn2_beta=jax.random.normal(ks[6], (cmid,), jnp.float32) * 0.1,
        bn2_mean=jax.random.normal(ks[7], (cmid,), jnp.float32) * 0.1,
        bn2_var=jax.random.uniform(ks[8], (cmid,), jnp.float32, 0.5, 1.5),
        conv2_w=jax.random.normal(ks[9], (growth_rate, cmid, 3, 3), jnp.float32)
        * (2.0 / (9 * cmid)) ** 0.5,
    )


def fold_params(p, eps=1e-5):
    """Fold inference BN into affine scale/shift; fold BN2 into conv1;
    pre-stack the 3x3 conv taps along the contraction axis."""
    s1 = p["bn1_gamma"] / jnp.sqrt(p["bn1_var"] + eps)
    b1 = p["bn1_beta"] - p["bn1_mean"] * s1
    s2 = p["bn2_gamma"] / jnp.sqrt(p["bn2_var"] + eps)
    b2 = p["bn2_beta"] - p["bn2_mean"] * s2
    cmid, cin = p["conv1_w"].shape
    growth = p["conv2_w"].shape[0]
    return dict(
        scale1=s1.reshape(cin, 1).astype(jnp.float32),
        shift1=b1.reshape(cin, 1).astype(jnp.float32),
        # y = bn2(conv1(z)) == (W1 * diag(s2)) z + b2   (conv1 is linear)
        w1f=(p["conv1_w"] * s2[:, None]).astype(jnp.bfloat16),   # (Cmid, Cin)
        b1f=b2.reshape(cmid, 1).astype(jnp.float32),
        # conv2 taps stacked along K: row g, col (ki*3+kj)*Cmid + m
        w2s=p["conv2_w"].transpose(0, 2, 3, 1).reshape(growth, 9 * cmid)
        .astype(jnp.bfloat16),
    )


# ---------------------------------------------------------------------------
# Pure-JAX reference (standard pad+slice conv semantics, matched precision)
# ---------------------------------------------------------------------------

def dense_layer_ref(x, fp):
    n, cin, h, w = x.shape
    cmid = fp["w1f"].shape[0]
    growth = fp["w2s"].shape[0]
    y = jnp.maximum(
        x * fp["scale1"].reshape(1, cin, 1, 1)
        + fp["shift1"].reshape(1, cin, 1, 1), 0.0)
    u = jnp.einsum("mi,nihw->nmhw", fp["w1f"], y.astype(jnp.bfloat16),
                   preferred_element_type=jnp.float32)
    t = jnp.maximum(u + fp["b1f"].reshape(1, cmid, 1, 1), 0.0)
    tp = jnp.pad(t.astype(jnp.bfloat16), ((0, 0), (0, 0), (1, 1), (1, 1)))
    w2 = fp["w2s"].reshape(growth, 3, 3, cmid)
    conv = jnp.zeros((n, growth, h, w), jnp.float32)
    for ki in range(3):
        for kj in range(3):
            conv = conv + jnp.einsum(
                "gm,nmhw->nghw", w2[:, ki, kj, :],
                tp[:, :, ki:ki + h, kj:kj + w],
                preferred_element_type=jnp.float32)
    return jnp.concatenate([conv, x], axis=1)


# ---------------------------------------------------------------------------
# Main
# ---------------------------------------------------------------------------

if __name__ == "__main__":
    key = jax.random.PRNGKey(0)
    k_param, k_input = jax.random.split(key)

    batch, in_channels, growth_rate, spatial = 2, 16, 8, 16
    raw = build_params(k_param, in_channels, growth_rate)
    fp = fold_params(raw)

    x = jax.random.normal(k_input, (batch, in_channels, spatial, spatial),
                          jnp.float32)

    _get_roll_fwd()          # resolve hardware roll direction once, pre-jit
    ref = dense_layer_ref(x, fp)

    # Default path: 2 "parallel" grid steps (one per v7x TensorCore).
    fwd = jax.jit(dense_layer_forward)
    out = jax.block_until_ready(fwd(x, fp))
    assert out.shape == (batch, in_channels + growth_rate, spatial, spatial), \
        out.shape
    assert bool(jnp.all(jnp.isfinite(out)))
    max_err = float(jnp.max(jnp.abs(out - ref)))
    assert max_err < 2e-2, f"max abs error {max_err}"

    # v5e/v6e-preferred path: one grid step, batch folded into lanes (N=512).
    fwd1 = jax.jit(functools.partial(dense_layer_forward,
                                     images_per_block=batch))
    out1 = jax.block_until_ready(fwd1(x, fp))
    max_err1 = float(jnp.max(jnp.abs(out1 - ref)))
    assert max_err1 < 2e-2, f"max abs error (lane-batched) {max_err1}"

    print("KERNEL_OK")
</pallas_src>

<mosaic_0001>
module attributes {stable_mosaic.version = 11 : i64} {
  func.func @k(%arg0: memref<8x128xi32, #tpu.memory_space<vmem>>, %arg1: memref<8x128xi32, #tpu.memory_space<vmem>>) attributes {dimension_semantics = [], scalar_prefetch = 0 : i64, scratch_operands = 0 : i64, tpu.core_type = #tpu.core_type<tc>} {
    %c0 = arith.constant 0 : index
    %c0_0 = arith.constant 0 : index
    %0 = vector.load %arg0[%c0, %c0_0] : memref<8x128xi32, #tpu.memory_space<vmem>>, vector<8x128xi32>
    %c1_i32 = arith.constant 1 : i32
    %1 = tpu.dynamic_rotate %0 by %c1_i32 dim 1 : vector<8x128xi32>, i32 -> vector<8x128xi32>
    %c0_1 = arith.constant 0 : index
    %c0_2 = arith.constant 0 : index
    %2 = vector.load %arg1[%c0_1, %c0_2] : memref<8x128xi32, #tpu.memory_space<vmem>>, vector<8x128xi32>
    tpu.vector_store %arg1[%c0_1, %c0_2], %1 {strides = array<i32>} : memref<8x128xi32, #tpu.memory_space<vmem>>, vector<8x128xi32>,
    return
  }
}

</mosaic_0001>

<llo_original>
// kernel: tpu_custom_call.1
$region0: #{tpu_custom_call.1}
  #allocation0 [shape = 'u32[]', space=smem, size = 0x4, offset = 0x4, fixed_abs, tag = 'smem constant byte address 0x4 - core index']
  #allocation1 [shape = 'u32[144,128]{1,0:T(1,128)}', space=vmem, size = 0x12000, scoped, tag = 'internal scratch']
  %s0 = inlined_call_operand.hbm [shape: s32[8,128], index: 0, kind: input, shape index: {}]
  %s1 = inlined_call_operand.hbm [shape: s32[8,128], index: 1, kind: output, shape index: {}]
  %s2 = sld [smem:[#allocation0]]
  $region18: #{tpu_custom_call.1} parent=0
    _
  %s4 = ssub.s32 1, %s2
  %s5 = scalar_select 0, %s4, %s2
  $region1: #{tpu_custom_call.1} parent=0
    #allocation2 [shape = 'u8[4096]{0}', space=vmem, size = 0x1000, scoped, tag = 'input window, operand 0, single buffered']
    #allocation3 [shape = 's32[1]{0}', space=sflag, size = 0x4, scoped, tag = 'scoped memory for tpu_custom_call.1']
    #allocation4 [shape = 's32[1]{0}', space=sflag, size = 0x4, scoped, tag = 'scoped memory for tpu_custom_call.1']
    #allocation5 [shape = 'u8[4096]{0}', space=vmem, size = 0x1000, scoped, tag = 'output window, operand 0, single buffered']
    %6 = vsyncpa [#allocation3], 0
    %7 = vsyncpa [#allocation4], 0
    // Predicated region
    $region2: #{tpu_custom_call.1} parent=1 // pred_check
      _
    $region3: #{tpu_custom_call.1} parent=1 // pred_check_branch
      %9 = sbr.rel (0) target = $region5
    $region4: #{tpu_custom_call.1} parent=1 // pred_region
      %s11 = ssub.s32 128, 128
      %12 = vsyncadd [#allocation3], %s11
      %s14 = sshll.u32 [#allocation2], 4
      %s15 = int_to_ptr.vmem [resolvable:$true] %s14
      %17 = dma.hbm_to_vmem [thread:$0]  %s0, 128, %s15, [#allocation3]
    $region5: #{tpu_custom_call.1} parent=1 // pred_fallthru
      _
    // Predicated region
    $region6: #{tpu_custom_call.1} parent=1 // pred_check
      _
    $region7: #{tpu_custom_call.1} parent=1 // pred_check_branch
      %19 = sbr.rel (0) target = $region9
    $region8: #{tpu_custom_call.1} parent=1 // pred_region
      %20 = dma.done [#allocation3], 128
    $region9: #{tpu_custom_call.1} parent=1 // pred_fallthru
      _
    %v21 = vld [vmem:[#allocation2] sm:$0xff]
    %22 = vrot.lane.b32.xlu0 %v21, 1
    %v23 = vpop.permute.xlu0 %22
    %24 = vst [vmem:[#allocation5] sm:$0xff] %v23
    // Predicated region
    $region10: #{tpu_custom_call.1} parent=1 // pred_check
      _
    $region11: #{tpu_custom_call.1} parent=1 // pred_check_branch
      %26 = sbr.rel (0) target = $region13
    $region12: #{tpu_custom_call.1} parent=1 // pred_region
      %s28 = ssub.s32 128, 128
      %29 = vsyncadd [#allocation4], %s28
      %s31 = sshll.u32 [#allocation5], 4
      %s32 = int_to_ptr.vmem [resolvable:$true] %s31
      %34 = dma.vmem_to_hbm [thread:$0]  %s32, 128, %s1, [#allocation4]
    $region13: #{tpu_custom_call.1} parent=1 // pred_fallthru
      _
    // Predicated region
    $region14: #{tpu_custom_call.1} parent=1 // pred_check
      _
    $region15: #{tpu_custom_call.1} parent=1 // pred_check_branch
      %36 = sbr.rel (0) target = $region17
    $region16: #{tpu_custom_call.1} parent=1 // pred_region
      %37 = dma.done [#allocation4], 128
    $region17: #{tpu_custom_call.1} parent=1 // pred_fallthru
      _
    %38 = vsyncpa [#allocation3], 1
    %39 = vsyncpa [#allocation4], 1

</llo_original>
